<compile_context>
chip_gen: v7x
topology: tpu7x:2x2x1
jax: 0.10.0
libtpu: 0.0.40
codegen_flags: <defaults>
</compile_context>

<pallas_src>
import jax
import jax.numpy as jnp
from jax.experimental import pallas as pl
from jax.experimental.pallas import tpu as pltpu


def _outconv_kernel(w_ref, b_ref, x_ref, o_ref):
    """1x1 conv on one channel-major tile.

    w_ref: SMEM (C_out*C_in,) flattened conv weight, row-major [co, ci].
    b_ref: SMEM (C_out,) bias.
    x_ref: VMEM (1, C_in, TS) input tile  (lane axis = spatial, dense).
    o_ref: VMEM (1, C_out, TS) output tile (lane axis = spatial, dense).
    """
    c_in = x_ref.shape[1]
    c_out = o_ref.shape[1]

    x = x_ref[...].astype(jnp.float32)            # (1, C_in, TS), loaded once

    # Fully unrolled C_out * C_in VPU FMAs (scalar weight broadcast over lanes).
    for co in range(c_out):
        acc = x[0, 0] * w_ref[co * c_in + 0]
        for ci in range(1, c_in):
            acc = acc + x[0, ci] * w_ref[co * c_in + ci]
        o_ref[0, co, :] = (acc + b_ref[co]).astype(o_ref.dtype)


def _pick_tile(hw_pad, c_in, itemsize, budget_bytes=4 << 20):
    """Largest spatial tile that divides hw_pad, stays a multiple of 128,
    and keeps the per-step input tile under a modest VMEM budget."""
    ts = hw_pad
    while (ts % 2 == 0 and (ts // 2) % 128 == 0
           and c_in * ts * itemsize > budget_bytes):
        ts //= 2
    return ts


def outconv_pallas(x_nchw, weight, bias):
    """1x1 conv forward (nn.Conv2d(kernel_size=1) semantics).

    x_nchw: (N, C_in, H, W)
    weight: (C_out, C_in, 1, 1)  -- PyTorch Conv2d weight layout
    bias:   (C_out,)
    returns (N, C_out, H, W)
    """
    N, C_in, H, W = x_nchw.shape
    C_out = weight.shape[0]
    HW = H * W

    # Free reshape: NCHW stays NCHW, spatial flattened onto the lane axis.
    x3 = x_nchw.reshape(N, C_in, HW)

    # Only pad if H*W is not lane-aligned (not hit for 16x16).
    if HW % 128 == 0:
        HW_pad = HW
    else:
        HW_pad = ((HW + 127) // 128) * 128
        x3 = jnp.pad(x3, ((0, 0), (0, 0), (0, HW_pad - HW)))

    TS = _pick_tile(HW_pad, C_in, x3.dtype.itemsize)
    grid = (N, HW_pad // TS)

    # Scalar-prefetched parameters (land in SMEM, read as cheap scalars).
    w_flat = weight.reshape(C_out, C_in).reshape(-1).astype(jnp.float32)
    b_flat = bias.reshape(-1).astype(jnp.float32)

    out = pl.pallas_call(
        _outconv_kernel,
        out_shape=jax.ShapeDtypeStruct((N, C_out, HW_pad), x_nchw.dtype),
        grid_spec=pltpu.PrefetchScalarGridSpec(
            num_scalar_prefetch=2,
            grid=grid,
            in_specs=[
                # (1, C_in, TS): C_in equals the full array dim, TS multiple of 128.
                pl.BlockSpec((1, C_in, TS), lambda n, s, w_s, b_s: (n, 0, s)),
            ],
            out_specs=pl.BlockSpec((1, C_out, TS), lambda n, s, w_s, b_s: (n, 0, s)),
        ),
        compiler_params=pltpu.CompilerParams(
            dimension_semantics=("parallel", "parallel")),
    )(w_flat, b_flat, x3)

    if HW_pad != HW:
        out = out[:, :, :HW]
    return out.reshape(N, C_out, H, W)


if __name__ == "__main__":
    # Module config: OutConv(in_channels=4, out_channels=3)
    N, C_in, C_out, H, W = 2, 4, 3, 16, 16

    key = jax.random.PRNGKey(0)
    kx, kw, kb = jax.random.split(key, 3)

    x = jax.random.normal(kx, (N, C_in, H, W), dtype=jnp.float32)
    weight = jax.random.normal(kw, (C_out, C_in, 1, 1), dtype=jnp.float32) * 0.1
    bias = jax.random.normal(kb, (C_out,), dtype=jnp.float32) * 0.1

    out = outconv_pallas(x, weight, bias)
    out = jax.block_until_ready(out)

    # Reference check in plain JAX (same semantics as nn.Conv2d k=1).
    ref = jnp.einsum("nchw,oc->nohw", x, weight.reshape(C_out, C_in)) \
        + bias.reshape(1, C_out, 1, 1)
    assert out.shape == (N, C_out, H, W)
    assert jnp.allclose(out, ref, atol=1e-5, rtol=1e-5)

    print("KERNEL_OK")
</pallas_src>

<mosaic_0001>
module attributes {stable_mosaic.version = 11 : i64} {
  func.func @_outconv_kernel(%arg0: i32, %arg1: i32, %arg2: memref<12xf32, #tpu.memory_space<smem>>, %arg3: memref<3xf32, #tpu.memory_space<smem>>, %arg4: memref<1x4x256xf32, #tpu.memory_space<vmem>>, %arg5: memref<1x3x256xf32, #tpu.memory_space<vmem>>) attributes {dimension_semantics = [#tpu.dimension_semantics<parallel>, #tpu.dimension_semantics<parallel>], iteration_bounds = array<i64: 2, 1>, scalar_prefetch = 2 : i64, scratch_operands = 0 : i64, tpu.core_type = #tpu.core_type<tc>, window_params = [{transform_indices = @transform_0, window_bounds = array<i64: 1, 4, 256>}, {transform_indices = @transform_1, window_bounds = array<i64: 1, 3, 256>}]} {
    %c0 = arith.constant 0 : index
    %c0_0 = arith.constant 0 : index
    %c0_1 = arith.constant 0 : index
    %0 = vector.load %arg4[%c0, %c0_0, %c0_1] : memref<1x4x256xf32, #tpu.memory_space<vmem>>, vector<1x4x256xf32>
    %1 = vector.extract_strided_slice %0 {offsets = [0, 0, 0], sizes = [1, 1, 256], strides = [1, 1, 1]} : vector<1x4x256xf32> to vector<1x1x256xf32>
    %2 = vector.shape_cast %1 : vector<1x1x256xf32> to vector<256xf32>
    %c0_2 = arith.constant 0 : index
    %3 = memref.load %arg2[%c0_2] : memref<12xf32, #tpu.memory_space<smem>>
    %4 = vector.broadcast %3 : f32 to vector<256xf32>
    %5 = arith.mulf %2, %4 : vector<256xf32>
    %6 = vector.extract_strided_slice %0 {offsets = [0, 1, 0], sizes = [1, 1, 256], strides = [1, 1, 1]} : vector<1x4x256xf32> to vector<1x1x256xf32>
    %7 = vector.shape_cast %6 : vector<1x1x256xf32> to vector<256xf32>
    %c1 = arith.constant 1 : index
    %8 = memref.load %arg2[%c1] : memref<12xf32, #tpu.memory_space<smem>>
    %9 = vector.broadcast %8 : f32 to vector<256xf32>
    %10 = arith.mulf %7, %9 : vector<256xf32>
    %11 = arith.addf %5, %10 : vector<256xf32>
    %12 = vector.extract_strided_slice %0 {offsets = [0, 2, 0], sizes = [1, 1, 256], strides = [1, 1, 1]} : vector<1x4x256xf32> to vector<1x1x256xf32>
    %13 = vector.shape_cast %12 : vector<1x1x256xf32> to vector<256xf32>
    %c2 = arith.constant 2 : index
    %14 = memref.load %arg2[%c2] : memref<12xf32, #tpu.memory_space<smem>>
    %15 = vector.broadcast %14 : f32 to vector<256xf32>
    %16 = arith.mulf %13, %15 : vector<256xf32>
    %17 = arith.addf %11, %16 : vector<256xf32>
    %18 = vector.extract_strided_slice %0 {offsets = [0, 3, 0], sizes = [1, 1, 256], strides = [1, 1, 1]} : vector<1x4x256xf32> to vector<1x1x256xf32>
    %19 = vector.shape_cast %18 : vector<1x1x256xf32> to vector<256xf32>
    %c3 = arith.constant 3 : index
    %20 = memref.load %arg2[%c3] : memref<12xf32, #tpu.memory_space<smem>>
    %21 = vector.broadcast %20 : f32 to vector<256xf32>
    %22 = arith.mulf %19, %21 : vector<256xf32>
    %23 = arith.addf %17, %22 : vector<256xf32>
    %c0_3 = arith.constant 0 : index
    %24 = memref.load %arg3[%c0_3] : memref<3xf32, #tpu.memory_space<smem>>
    %25 = vector.broadcast %24 : f32 to vector<256xf32>
    %26 = arith.addf %23, %25 : vector<256xf32>
    %c0_4 = arith.constant 0 : index
    %c0_5 = arith.constant 0 : index
    %c0_6 = arith.constant 0 : index
    %27 = vector.load %arg5[%c0_4, %c0_5, %c0_6] : memref<1x3x256xf32, #tpu.memory_space<vmem>>, vector<1x1x256xf32>
    %28 = vector.shape_cast %27 : vector<1x1x256xf32> to vector<256xf32>
    %29 = vector.shape_cast %26 : vector<256xf32> to vector<1x1x256xf32>
    tpu.vector_store %arg5[%c0_4, %c0_5, %c0_6], %29 {strides = array<i32>} : memref<1x3x256xf32, #tpu.memory_space<vmem>>, vector<1x1x256xf32>,
    %30 = vector.extract_strided_slice %0 {offsets = [0, 0, 0], sizes = [1, 1, 256], strides = [1, 1, 1]} : vector<1x4x256xf32> to vector<1x1x256xf32>
    %31 = vector.shape_cast %30 : vector<1x1x256xf32> to vector<256xf32>
    %c4 = arith.constant 4 : index
    %32 = memref.load %arg2[%c4] : memref<12xf32, #tpu.memory_space<smem>>
    %33 = vector.broadcast %32 : f32 to vector<256xf32>
    %34 = arith.mulf %31, %33 : vector<256xf32>
    %35 = vector.extract_strided_slice %0 {offsets = [0, 1, 0], sizes = [1, 1, 256], strides = [1, 1, 1]} : vector<1x4x256xf32> to vector<1x1x256xf32>
    %36 = vector.shape_cast %35 : vector<1x1x256xf32> to vector<256xf32>
    %c5 = arith.constant 5 : index
    %37 = memref.load %arg2[%c5] : memref<12xf32, #tpu.memory_space<smem>>
    %38 = vector.broadcast %37 : f32 to vector<256xf32>
    %39 = arith.mulf %36, %38 : vector<256xf32>
    %40 = arith.addf %34, %39 : vector<256xf32>
    %41 = vector.extract_strided_slice %0 {offsets = [0, 2, 0], sizes = [1, 1, 256], strides = [1, 1, 1]} : vector<1x4x256xf32> to vector<1x1x256xf32>
    %42 = vector.shape_cast %41 : vector<1x1x256xf32> to vector<256xf32>
    %c6 = arith.constant 6 : index
    %43 = memref.load %arg2[%c6] : memref<12xf32, #tpu.memory_space<smem>>
    %44 = vector.broadcast %43 : f32 to vector<256xf32>
    %45 = arith.mulf %42, %44 : vector<256xf32>
    %46 = arith.addf %40, %45 : vector<256xf32>
    %47 = vector.extract_strided_slice %0 {offsets = [0, 3, 0], sizes = [1, 1, 256], strides = [1, 1, 1]} : vector<1x4x256xf32> to vector<1x1x256xf32>
    %48 = vector.shape_cast %47 : vector<1x1x256xf32> to vector<256xf32>
    %c7 = arith.constant 7 : index
    %49 = memref.load %arg2[%c7] : memref<12xf32, #tpu.memory_space<smem>>
    %50 = vector.broadcast %49 : f32 to vector<256xf32>
    %51 = arith.mulf %48, %50 : vector<256xf32>
    %52 = arith.addf %46, %51 : vector<256xf32>
    %c1_7 = arith.constant 1 : index
    %53 = memref.load %arg3[%c1_7] : memref<3xf32, #tpu.memory_space<smem>>
    %54 = vector.broadcast %53 : f32 to vector<256xf32>
    %55 = arith.addf %52, %54 : vector<256xf32>
    %c0_8 = arith.constant 0 : index
    %c1_9 = arith.constant 1 : index
    %c0_10 = arith.constant 0 : index
    %56 = vector.load %arg5[%c0_8, %c1_9, %c0_10] : memref<1x3x256xf32, #tpu.memory_space<vmem>>, vector<1x1x256xf32>
    %57 = vector.shape_cast %56 : vector<1x1x256xf32> to vector<256xf32>
    %58 = vector.shape_cast %55 : vector<256xf32> to vector<1x1x256xf32>
    tpu.vector_store %arg5[%c0_8, %c1_9, %c0_10], %58 {strides = array<i32>} : memref<1x3x256xf32, #tpu.memory_space<vmem>>, vector<1x1x256xf32>,
    %59 = vector.extract_strided_slice %0 {offsets = [0, 0, 0], sizes = [1, 1, 256], strides = [1, 1, 1]} : vector<1x4x256xf32> to vector<1x1x256xf32>
    %60 = vector.shape_cast %59 : vector<1x1x256xf32> to vector<256xf32>
    %c8 = arith.constant 8 : index
    %61 = memref.load %arg2[%c8] : memref<12xf32, #tpu.memory_space<smem>>
    %62 = vector.broadcast %61 : f32 to vector<256xf32>
    %63 = arith.mulf %60, %62 : vector<256xf32>
    %64 = vector.extract_strided_slice %0 {offsets = [0, 1, 0], sizes = [1, 1, 256], strides = [1, 1, 1]} : vector<1x4x256xf32> to vector<1x1x256xf32>
    %65 = vector.shape_cast %64 : vector<1x1x256xf32> to vector<256xf32>
    %c9 = arith.constant 9 : index
    %66 = memref.load %arg2[%c9] : memref<12xf32, #tpu.memory_space<smem>>
    %67 = vector.broadcast %66 : f32 to vector<256xf32>
    %68 = arith.mulf %65, %67 : vector<256xf32>
    %69 = arith.addf %63, %68 : vector<256xf32>
    %70 = vector.extract_strided_slice %0 {offsets = [0, 2, 0], sizes = [1, 1, 256], strides = [1, 1, 1]} : vector<1x4x256xf32> to vector<1x1x256xf32>
    %71 = vector.shape_cast %70 : vector<1x1x256xf32> to vector<256xf32>
    %c10 = arith.constant 10 : index
    %72 = memref.load %arg2[%c10] : memref<12xf32, #tpu.memory_space<smem>>
    %73 = vector.broadcast %72 : f32 to vector<256xf32>
    %74 = arith.mulf %71, %73 : vector<256xf32>
    %75 = arith.addf %69, %74 : vector<256xf32>
    %76 = vector.extract_strided_slice %0 {offsets = [0, 3, 0], sizes = [1, 1, 256], strides = [1, 1, 1]} : vector<1x4x256xf32> to vector<1x1x256xf32>
    %77 = vector.shape_cast %76 : vector<1x1x256xf32> to vector<256xf32>
    %c11 = arith.constant 11 : index
    %78 = memref.load %arg2[%c11] : memref<12xf32, #tpu.memory_space<smem>>
    %79 = vector.broadcast %78 : f32 to vector<256xf32>
    %80 = arith.mulf %77, %79 : vector<256xf32>
    %81 = arith.addf %75, %80 : vector<256xf32>
    %c2_11 = arith.constant 2 : index
    %82 = memref.load %arg3[%c2_11] : memref<3xf32, #tpu.memory_space<smem>>
    %83 = vector.broadcast %82 : f32 to vector<256xf32>
    %84 = arith.addf %81, %83 : vector<256xf32>
    %c0_12 = arith.constant 0 : index
    %c2_13 = arith.constant 2 : index
    %c0_14 = arith.constant 0 : index
    %85 = vector.load %arg5[%c0_12, %c2_13, %c0_14] : memref<1x3x256xf32, #tpu.memory_space<vmem>>, vector<1x1x256xf32>
    %86 = vector.shape_cast %85 : vector<1x1x256xf32> to vector<256xf32>
    %87 = vector.shape_cast %84 : vector<256xf32> to vector<1x1x256xf32>
    tpu.vector_store %arg5[%c0_12, %c2_13, %c0_14], %87 {strides = array<i32>} : memref<1x3x256xf32, #tpu.memory_space<vmem>>, vector<1x1x256xf32>,
    return
  }
  func.func @transform_0(%arg0: i32, %arg1: i32, %arg2: memref<12xf32, #tpu.memory_space<smem>>, %arg3: memref<3xf32, #tpu.memory_space<smem>>) -> (i32, i32, i32) {
    %c0_i32 = arith.constant 0 : i32
    %c0_i32_0 = arith.constant 0 : i32
    return %arg0, %c0_i32, %arg1 : i32, i32, i32
  }
  func.func @transform_1(%arg0: i32, %arg1: i32, %arg2: memref<12xf32, #tpu.memory_space<smem>>, %arg3: memref<3xf32, #tpu.memory_space<smem>>) -> (i32, i32, i32) {
    %c0_i32 = arith.constant 0 : i32
    %c0_i32_0 = arith.constant 0 : i32
    return %arg0, %c0_i32, %arg1 : i32, i32, i32
  }
}

</mosaic_0001>

<llo_original>
// kernel: tpu_custom_call.1
$region0: #{tpu_custom_call.1}
  #allocation0 [shape = 'u32[]', space=smem, size = 0x4, offset = 0x4, fixed_abs, tag = 'smem constant byte address 0x4 - core index']
  #allocation1 [shape = 'u32[144,128]{1,0:T(1,128)}', space=vmem, size = 0x12000, scoped, tag = 'internal scratch']
  #allocation2 [shape = 's32[1]{0}', space=sflag, size = 0x4, scoped, tag = 'scoped memory for tpu_custom_call.1']
  #allocation3 [shape = 'u8[512]{0}', space=smem, size = 0x200, scoped, tag = 'prefetched SMEM operand 0']
  #allocation4 [shape = 'u8[512]{0}', space=smem, size = 0x200, scoped, tag = 'prefetched SMEM operand 1']
  %s0 = inlined_call_operand.hbm [shape: f32[12], index: 0, kind: input, shape index: {}]
  %s1 = inlined_call_operand.vmem [shape: f32[3], index: 1, kind: input, shape index: {}]
  %s2 = inlined_call_operand.hbm [shape: f32[2,4,256], index: 2, kind: input, shape index: {}]
  %s3 = inlined_call_operand.vmem [shape: f32[2,3,256], index: 3, kind: output, shape index: {}]
  %s4 = sld [smem:[#allocation0]]
  $region41: #{tpu_custom_call.1} parent=0
    _
  %s6 = ssub.s32 1, %s4
  %s7 = scalar_select 0, %s6, %s4
  %9 = dma.hbm_to_smem %s0, 16, [#allocation3], [#allocation2]
  %s10 = sshll.u32 %s1, 4
  %s11 = int_to_ptr.vmem [resolvable:$true] %s10
  %13 = dma.vmem_to_smem %s11, 16, [#allocation4], [#allocation2]
  %14 = dma.done [#allocation2], 32
  %15 = sfence
  $region1: #{tpu_custom_call.1} parent=0
    #allocation5 [shape = 'u8[8192]{0}', space=vmem, size = 0x2000, scoped, tag = 'input window, operand 2']
    #allocation6 [shape = 's32[2]{0}', space=sflag, size = 0x8, scoped, tag = 'scoped memory for tpu_custom_call.1']
    %16 = vsyncpa [#allocation6], 0
    %s17 = scalar_lea.sflag [#allocation6], 1
    %18 = vsyncpa %s17, 0
    loop: start=0, step=1, limit=4
    $region2: #{tpu_custom_call.1} parent=1 // loop_pre_header
      _
    $region3: #{tpu_custom_call.1} parent=1 // loop_header
      %s20 = sphi 0, %s24
      %p21 = scmp.ge.s32.totalorder %s20, 4
      %s27 = sphi 0, %s39
      %s28 = sphi 0, %s35
      %s29 = sphi 0, %s27
      %s30 = sphi 0, %s28
      %s31 = sphi 0, %s29
      %s32 = sphi 0, %s30
      %s44 = sphi 0, %s46
      %s47 = sphi 0, %s44
      %s48 = sphi 0, %s47
      %s64 = sphi 0, %s48
      %s72 = sphi 0, %s74
      %s75 = sphi 0, %s72
      %s76 = sphi 0, %s75
      %s92 = sphi 0, %s76
    $region4: #{tpu_custom_call.1} parent=1 // loop_header_branch
      %23 = sbr.rel (%p21) target = $region8
    $region5: #{tpu_custom_call.1} parent=1 // loop_body
      %s25 = ssub.s32 %s20, 1
      %s26 = ssub.s32 %s20, 2
      %s33 = sadd.s32 1, %s28
      %p34 = scmp.ge.s32.totalorder %s33, 1
      %s35 = scalar_select %p34, 0, %s33
      %s36 = sadd.s32 1, %s27
      %s37 = scalar_select %p34, %s36, %s27
      %p38 = scmp.ge.s32.totalorder %s37, 2
      %s39 = scalar_select %p38, 0, %s37
      %s40 = ssub.s32 %s27, %s39
      %s41 = ssub.s32 %s28, %s35
      %s42 = sor.u32 %s40, %s41
      %p43 = scmp.eq.s32.totalorder %s42, 0
      %s45 = sadd.s32 %s44, 1
      %s46 = scalar_select %p43, %s44, %s45
      %p49 = pneg %p43
      %p50 = scmp.eq.s32.totalorder %s20, 1
      %p51 = por %p49, %p50
      %p52 = scmp.ne.s32.totalorder %s44, %s47
      %p53 = scmp.eq.s32.totalorder %s20, 0
      %p54 = por %p52, %p53
      %p55 = scmp.ne.s32.totalorder %s44, %s47
      %p56 = scmp.eq.s32.totalorder %s25, 1
      %p57 = por %p55, %p56
      %p58 = scmp.ne.s32.totalorder %s47, %s48
      %p59 = scmp.eq.s32.totalorder %s25, 0
      %p60 = por %p58, %p59
      %p61 = scmp.ne.s32.totalorder %s47, %s48
      %p62 = scmp.eq.s32.totalorder %s26, 1
      %p63 = por %p61, %p62
      %p65 = scmp.ne.s32.totalorder %s48, %s64
      %p66 = scmp.eq.s32.totalorder %s26, 0
      %p67 = por %p65, %p66
      %s68 = ssub.s32 %s27, %s39
      %s69 = ssub.s32 %s28, %s35
      %s70 = sor.u32 %s68, %s69
      %p71 = scmp.eq.s32.totalorder %s70, 0
      %s73 = sadd.s32 %s72, 1
      %s74 = scalar_select %p71, %s72, %s73
      %p77 = pneg %p71
      %p78 = scmp.eq.s32.totalorder %s20, 1
      %p79 = por %p77, %p78
      %p80 = scmp.ne.s32.totalorder %s72, %s75
      %p81 = scmp.eq.s32.totalorder %s20, 0
      %p82 = por %p80, %p81
      %p83 = scmp.ne.s32.totalorder %s72, %s75
      %p84 = scmp.eq.s32.totalorder %s25, 1
      %p85 = por %p83, %p84
      %p86 = scmp.ne.s32.totalorder %s75, %s76
      %p87 = scmp.eq.s32.totalorder %s25, 0
      %p88 = por %p86, %p87
      %p89 = scmp.ne.s32.totalorder %s75, %s76
      %p90 = scmp.eq.s32.totalorder %s26, 1
      %p91 = por %p89, %p90
      %p93 = scmp.ne.s32.totalorder %s76, %s92
      %p94 = scmp.eq.s32.totalorder %s26, 0
      %p95 = por %p93, %p94
      %p96 = scmp.le.s32.totalorder 1, %s20
      %p97 = scmp.lt.s32.totalorder %s20, 3
      %p98 = pnand %p96, %p97
      %p99 = pneg %p98
      // Predicated region
      $region9: #{tpu_custom_call.1} parent=5 // pred_check
        _
      $region10: #{tpu_custom_call.1} parent=5 // pred_check_branch
        %101 = sbr.rel (%p98) target = $region12
      $region11: #{tpu_custom_call.1} parent=5 // pred_region
        %s102 = ssub.s32 %s20, 1
      $region12: #{tpu_custom_call.1} parent=5 // pred_fallthru
        _
      %p103 = scmp.lt.s32.totalorder %s20, 2
      // Predicated region
      $region13: #{tpu_custom_call.1} parent=5 // pred_check
        %p104 = pneg %p103
      $region14: #{tpu_custom_call.1} parent=5 // pred_check_branch
        %106 = sbr.rel (%p104) target = $region16
      $region15: #{tpu_custom_call.1} parent=5 // pred_region
        // Predicated region
        $region17: #{tpu_custom_call.1} parent=15 // pred_check
          %p107 = pneg %p54
        $region18: #{tpu_custom_call.1} parent=15 // pred_check_branch
          %109 = sbr.rel (%p107) target = $region20
        $region19: #{tpu_custom_call.1} parent=15 // pred_region
          %s110 = sand.u32 %s44, 1
          %s111 = scalar_lea.sflag [#allocation6], %s110
          %s112 = sand.u32 %s44, 1
          %s113 = smul.addr %s112, 8
          %s114 = scalar_lea.vmem [#allocation5], %s113
          %s115 = smul.u32 2, %s28
          %s117 = ssub.s32 128, 128
          %118 = vsyncadd %s111, %s117
          %s119 = smul.addr %s27, 2
          %s120 = sadd.s32 %s115, %s119
          %s121 = smul.addr %s120, 64
          %s122 = scalar_lea.hbm %s2, %s121
          %s124 = sshll.u32 %s114, 4
          %s125 = int_to_ptr.vmem [resolvable:$true] %s124
          %127 = dma.hbm_to_vmem [thread:$0]  %s122, 128, %s125, %s111
        $region20: #{tpu_custom_call.1} parent=15 // pred_fallthru
          _
      $region16: #{tpu_custom_call.1} parent=5 // pred_fallthru
        _
      %p128 = scmp.le.s32.totalorder 1, %s20
      %p129 = scmp.lt.s32.totalorder %s20, 3
      %p130 = pnand %p128, %p129
      %p131 = pneg %p130
      // Predicated region
      $region21: #{tpu_custom_call.1} parent=5 // pred_check
        _
      $region22: #{tpu_custom_call.1} parent=5 // pred_check_branch
        %133 = sbr.rel (%p130) target = $region24
      $region23: #{tpu_custom_call.1} parent=5 // pred_region
        %s134 = ssub.s32 %s20, 1
        %s135 = sand.u32 %s47, 1
        %s136 = scalar_lea.sflag [#allocation6], %s135
        %s137 = sand.u32 %s47, 1
        %s138 = smul.addr %s137, 8
        %s139 = scalar_lea.vmem [#allocation5], %s138
        // Predicated region
        $region25: #{tpu_custom_call.1} parent=23 // pred_check
          %p140 = pneg %p60
        $region26: #{tpu_custom_call.1} parent=23 // pred_check_branch
          %142 = sbr.rel (%p140) target = $region28
        $region27: #{tpu_custom_call.1} parent=23 // pred_region
          %143 = dma.done %s136, 128
        $region28: #{tpu_custom_call.1} parent=23 // pred_fallthru
          _
        %s144 = sand.u32 %s47, 1
        %s145 = scalar_lea.sflag [#allocation6], %s144
        %s146 = sand.u32 %s47, 1
        %s147 = smul.addr %s146, 8
        %s148 = scalar_lea.vmem [#allocation5], %s147
        %p149 = pneg %p60
        %p150 = pneg %p57
        %p151 = pneg %p88
        %p152 = pneg %p85
        %s153 = smul.u32 2, %s30
        %p154 = scmp.lt.s32.totalorder %s29, 1
        %s155 = scalar_select %p154, %s29, 1
        %p156 = scmp.lt.s32.totalorder %s153, 1
        %s157 = scalar_select %p156, %s153, 1
        %s158 = smul.addr %s155, 2
        %s159 = sadd.s32 %s157, %s158
        %s160 = smul.addr %s159, 4
        %s161 = scalar_lea.vmem %s3, %s160
        %s162 = smul.u32 2, %s30
        %s163 = smul.u32 2, %s30
        %p164 = scmp.lt.s32.totalorder %s29, 1
        %s165 = scalar_select %p164, %s29, 1
        %p166 = scmp.lt.s32.totalorder %s163, 1
        %s167 = scalar_select %p166, %s163, 1
        %s168 = smul.addr %s165, 2
        %s169 = sadd.s32 %s167, %s168
        %s170 = smul.addr %s169, 4
        %s171 = scalar_lea.vmem %s3, %s170
        %s172 = smul.u32 2, %s30
        %v173 = vld [vmem:[%s139] sm:$0xff]
        %s174 = sld [smem:[#allocation3]]
        %v175 = vstv %s174
        %v176 = vmul.f32 %v173, %v175
        %s177 = sld [smem:[#allocation3 + $0x1]]
        %v178 = vstv %s177
        %v179 = vmul.f32 %v173, %v178
        %v181 = vrot.slane %v179, 5
        %v182 = vrot.slane %v181, 4
        %v184 = vadd.f32 %v176, %v182
        %s185 = sld [smem:[#allocation3 + $0x2]]
        %v186 = vstv %s185
        %v187 = vmul.f32 %v173, %v186
        %v189 = vrot.slane %v187, 6
        %v190 = vrot.slane %v189, 4
        %v192 = vadd.f32 %v184, %v190
        %s193 = sld [smem:[#allocation3 + $0x3]]
        %v194 = vstv %s193
        %v195 = vmul.f32 %v173, %v194
        %v197 = vrot.slane %v195, 7
        %v198 = vrot.slane %v197, 4
        %v200 = vadd.f32 %v192, %v198
        %s201 = sld [smem:[#allocation4]]
        %v202 = vstv %s201
        %v203 = vadd.f32 %v200, %v202
        %v206 = vunpack.c.l.s4 1966171168
        %v207 = vunpack.c.0.s8 %v206
        %v208 = vlaneseq
        %v209 = vshrl.u32 %v208, 7
        %v210 = vsub.s32 %v207, %v209
        %v211 = vrot.slane %v203, %v210
        %v213 = vunpack.c.l.s4 1966171168
        %v214 = vunpack.c.0.s8 %v213
        %v215 = vlaneseq
        %v216 = vshrl.u32 %v215, 7
        %v217 = vsub.s32 %v214, %v216
        %v218 = vrot.slane %v211, %v217
        %v220 = vlaneseq
        %vm221 = vcmp.ge.s32.totalorder %v220, 0
        %vm222 = vcmp.lt.s32.totalorder %v220, 256
        %vm223 = vmand %vm221, %vm222
        %224 = vst.msk [vmem:[%s171] ss:$4 sm:$0x3] %vm223, %v218
        %s225 = sld [smem:[#allocation3 + $0x4]]
        %v226 = vstv %s225
        %v227 = vmul.f32 %v173, %v226
        %s228 = sld [smem:[#allocation3 + $0x5]]
        %v229 = vstv %s228
        %v230 = vmul.f32 %v173, %v229
        %v232 = vrot.slane %v230, 5
        %v233 = vrot.slane %v232, 4
        %v235 = vadd.f32 %v227, %v233
        %s236 = sld [smem:[#allocation3 + $0x6]]
        %v237 = vstv %s236
        %v238 = vmul.f32 %v173, %v237
        %v240 = vrot.slane %v238, 6
        %v241 = vrot.slane %v240, 4
        %v243 = vadd.f32 %v235, %v241
        %s244 = sld [smem:[#allocation3 + $0x7]]
        %v245 = vstv %s244
        %v246 = vmul.f32 %v173, %v245
        %v248 = vrot.slane %v246, 7
        %v249 = vrot.slane %v248, 4
        %v251 = vadd.f32 %v243, %v249
        %s252 = sld [smem:[#allocation4 + $0x1]]
        %v253 = vstv %s252
        %v254 = vadd.f32 %v251, %v253
        %v257 = vunpack.c.l.s4 1966171168
        %v258 = vunpack.c.0.s8 %v257
        %v259 = vlaneseq
        %v260 = vshrl.u32 %v259, 7
        %v261 = vsub.s32 %v258, %v260
        %v262 = vrot.slane %v254, %v261
        %v264 = vunpack.c.l.s4 1966171168
        %v265 = vunpack.c.0.s8 %v264
        %v266 = vlaneseq
        %v267 = vshrl.u32 %v266, 7
        %v268 = vsub.s32 %v265, %v267
        %v269 = vrot.slane %v262, %v268
        %s271 = scalar_lea.vmem %s171, 1
        %272 = vst.msk [vmem:[%s271] ss:$4 sm:$0x3] %vm223, %v269
        %s273 = sld [smem:[#allocation3 + $0x8]]
        %v274 = vstv %s273
        %v275 = vmul.f32 %v173, %v274
        %s276 = sld [smem:[#allocation3 + $0x9]]
        %v277 = vstv %s276
        %v278 = vmul.f32 %v173, %v277
        %v280 = vrot.slane %v278, 5
        %v281 = vrot.slane %v280, 4
        %v283 = vadd.f32 %v275, %v281
        %s284 = sld [smem:[#allocation3 + $0xa]]
        %v285 = vstv %s284
        %v286 = vmul.f32 %v173, %v285
        %v288 = vrot.slane %v286, 6
        %v289 = vrot.slane %v288, 4
        %v291 = vadd.f32 %v283, %v289
        %s292 = sld [smem:[#allocation3 + $0xb]]
        %v293 = vstv %s292
        %v294 = vmul.f32 %v173, %v293
        %v296 = vrot.slane %v294, 7
        %v297 = vrot.slane %v296, 4
        %v299 = vadd.f32 %v291, %v297
        %s300 = sld [smem:[#allocation4 + $0x2]]
        %v301 = vstv %s300
        %v302 = vadd.f32 %v299, %v301
        %v305 = vunpack.c.l.s4 1966171168
        %v306 = vunpack.c.0.s8 %v305
        %v307 = vlaneseq
        %v308 = vshrl.u32 %v307, 7
        %v309 = vsub.s32 %v306, %v308
        %v310 = vrot.slane %v302, %v309
        %v312 = vunpack.c.l.s4 1966171168
        %v313 = vunpack.c.0.s8 %v312
        %v314 = vlaneseq
        %v315 = vshrl.u32 %v314, 7
        %v316 = vsub.s32 %v313, %v315
        %v317 = vrot.slane %v310, %v316
        %s319 = scalar_lea.vmem %s171, 2
        %320 = vst.msk [vmem:[%s319] ss:$4 sm:$0x3] %vm223, %v317
        %s321 = smul.u32 2, %s30
        %p322 = scmp.lt.s32.totalorder %s29, 1
        %s323 = scalar_select %p322, %s29, 1
        %p324 = scmp.lt.s32.totalorder %s321, 1
        %s325 = scalar_select %p324, %s321, 1
        %s326 = smul.addr %s323, 2
        %s327 = sadd.s32 %s325, %s326
        %s328 = smul.addr %s327, 4
        %s329 = scalar_lea.vmem %s3, %s328
        // Predicated region
        $region29: #{tpu_custom_call.1} parent=23 // pred_check
          %p330 = pneg %p85
        $region30: #{tpu_custom_call.1} parent=23 // pred_check_branch
          %332 = sbr.rel (%p330) target = $region32
        $region31: #{tpu_custom_call.1} parent=23 // pred_region
          %s333 = smul.u32 2, %s30
        $region32: #{tpu_custom_call.1} parent=23 // pred_fallthru
          _
      $region24: #{tpu_custom_call.1} parent=5 // pred_fallthru
        _
      %p334 = scmp.le.s32.totalorder 2, %s20
      // Predicated region
      $region33: #{tpu_custom_call.1} parent=5 // pred_check
        %p335 = pneg %p334
      $region34: #{tpu_custom_call.1} parent=5 // pred_check_branch
        %337 = sbr.rel (%p335) target = $region36
      $region35: #{tpu_custom_call.1} parent=5 // pred_region
        %s338 = ssub.s32 %s20, 2
        // Predicated region
        $region37: #{tpu_custom_call.1} parent=35 // pred_check
          %p339 = pneg %p91
        $region38: #{tpu_custom_call.1} parent=35 // pred_check_branch
          %341 = sbr.rel (%p339) target = $region40
        $region39: #{tpu_custom_call.1} parent=35 // pred_region
          %s342 = smul.u32 2, %s32
          %p343 = scmp.lt.s32.totalorder %s31, 1
          %s344 = scalar_select %p343, %s31, 1
          %p345 = scmp.lt.s32.totalorder %s342, 1
          %s346 = scalar_select %p345, %s342, 1
          %s347 = smul.addr %s344, 2
          %s348 = sadd.s32 %s346, %s347
          %s349 = smul.addr %s348, 4
          %s350 = scalar_lea.vmem %s3, %s349
        $region40: #{tpu_custom_call.1} parent=35 // pred_fallthru
          _
      $region36: #{tpu_custom_call.1} parent=5 // pred_fallthru
        _
    $region6: #{tpu_custom_call.1} parent=1 // loop_footer
      %s24 = sadd.s32 1, %s20
    $region7: #{tpu_custom_call.1} parent=1 // loop_footer_branch
      %19 = sbr.rel target = $region3
    $region8: #{tpu_custom_call.1} parent=1 // loop_exit
      _
    %351 = vsyncpa [#allocation6], 1
    %s352 = scalar_lea.sflag [#allocation6], 1
    %353 = vsyncpa %s352, 1

</llo_original>
